<compile_context>
chip_gen: v5e
topology: v5e:2x2
jax: 0.10.0
libtpu: 0.0.40
codegen_flags: <defaults>
</compile_context>

<pallas_src>
import functools

import jax
import jax.numpy as jnp
from jax.experimental import pallas as pl
from jax.experimental.pallas import tpu as pltpu


def _round_up(n, m):
    return ((n + m - 1) // m) * m


def _softplus(x):
    # softplus(x) = max(x, 0) + log1p(exp(-|x|))  — one exp, one log1p.
    return jnp.maximum(x, 0.0) + jnp.log1p(jnp.exp(-jnp.abs(x)))


def _block_diag(a, b):
    top = jnp.concatenate([a, jnp.zeros((a.shape[0], b.shape[1]), a.dtype)], axis=1)
    bot = jnp.concatenate([jnp.zeros((b.shape[0], a.shape[1]), b.dtype), b], axis=1)
    return jnp.concatenate([top, bot], axis=0)


def acnet_kernel(x_ref,
                 w1_ref, b1_ref,      # fused first layers          [obs, 32+64]
                 w2_ref, b2_ref,      # block-diag second layers    [96, 16+32]
                 w3_ref, b3_ref,      # block-diag heads            [48, 2A+1]
                 out_ref,             # [tile_b, 2A + 1]  = mean | std | value
                 *, actions):
    x = x_ref[...]

    # Layer 1 (actor + critic share LHS x): one MXU pass, ReLU.
    h1 = jnp.dot(x, w1_ref[...], preferred_element_type=jnp.float32) + b1_ref[...]
    h1 = jnp.maximum(h1, 0.0)

    # Layer 2 (block-diagonal actor/critic weights): one MXU pass, ReLU.
    h2 = jnp.dot(h1, w2_ref[...], preferred_element_type=jnp.float32) + b2_ref[...]
    h2 = jnp.maximum(h2, 0.0)

    # Heads (block-diagonal mu|sigma head and value head): one MXU pass.
    out = jnp.dot(h2, w3_ref[...], preferred_element_type=jnp.float32) + b3_ref[...]

    # softplus only on the sigma columns [actions, 2*actions).
    col = jax.lax.broadcasted_iota(jnp.int32, out.shape, 1)
    is_sigma = (col >= actions) & (col < 2 * actions)
    out_ref[...] = jnp.where(is_sigma, _softplus(out), out)


def acnet_forward(x, params, *, tile_b=512):
    """x: [B, observations] float32. params: dict of transposed weights/biases."""
    B, obs = x.shape
    actions = params["mu_w"].shape[1]

    # Wrapper-side fusion of the two branches (cheap, done under jit).
    w1 = jnp.concatenate([params["a_w1"], params["c_w1"]], axis=1)         # [obs, 96]
    b1 = jnp.concatenate([params["a_b1"], params["c_b1"]], axis=1)         # [1, 96]
    w2 = _block_diag(params["a_w2"], params["c_w2"])                       # [96, 48]
    b2 = jnp.concatenate([params["a_b2"], params["c_b2"]], axis=1)         # [1, 48]
    head_w = jnp.concatenate([params["mu_w"], params["sg_w"]], axis=1)     # [16, 2A]
    w3 = _block_diag(head_w, params["c_w3"])                               # [48, 2A+1]
    b3 = jnp.concatenate([params["mu_b"], params["sg_b"], params["c_b3"]],
                         axis=1)                                           # [1, 2A+1]

    # Batch tiling: multiple of 8 sublanes, pad batch to a whole number of tiles.
    tile_b = max(8, min(tile_b, _round_up(B, 8)))
    b_pad = _round_up(B, tile_b)
    if b_pad != B:
        x = jnp.pad(x, ((0, b_pad - B), (0, 0)))

    out_w = 2 * actions + 1
    grid = (b_pad // tile_b,)

    def resident(arr):
        # Weight/bias block that stays resident in VMEM across all grid steps.
        return pl.BlockSpec(arr.shape, lambda i: (0, 0))

    kernel = functools.partial(acnet_kernel, actions=actions)

    out = pl.pallas_call(
        kernel,
        out_shape=jax.ShapeDtypeStruct((b_pad, out_w), jnp.float32),
        grid=grid,
        in_specs=[
            pl.BlockSpec((tile_b, obs), lambda i: (i, 0)),     # x tile
            resident(w1), resident(b1),
            resident(w2), resident(b2),
            resident(w3), resident(b3),
        ],
        out_specs=pl.BlockSpec((tile_b, out_w), lambda i: (i, 0)),
        compiler_params=pltpu.CompilerParams(
            dimension_semantics=("parallel",),
        ),
    )(x, w1, b1, w2, b2, w3, b3)

    out = out[:B]
    mean = out[:, :actions]
    std = out[:, actions:2 * actions]
    value = out[:, 2 * actions:]
    return mean, std, value


def init_params(key, observations, actions):
    """PyTorch-default-style init (uniform +/- 1/sqrt(fan_in)).

    Weights are stored pre-transposed as [in, out]; biases as [1, out].
    """
    def linear(key, fan_in, fan_out):
        kw, kb = jax.random.split(key)
        bound = 1.0 / jnp.sqrt(jnp.float32(fan_in))
        w = jax.random.uniform(kw, (fan_in, fan_out), jnp.float32, -bound, bound)
        b = jax.random.uniform(kb, (1, fan_out), jnp.float32, -bound, bound)
        return w, b

    keys = jax.random.split(key, 7)
    p = {}
    p["a_w1"], p["a_b1"] = linear(keys[0], observations, 32)
    p["a_w2"], p["a_b2"] = linear(keys[1], 32, 16)
    p["mu_w"], p["mu_b"] = linear(keys[2], 16, actions)
    p["sg_w"], p["sg_b"] = linear(keys[3], 16, actions)
    p["c_w1"], p["c_b1"] = linear(keys[4], observations, 64)
    p["c_w2"], p["c_b2"] = linear(keys[5], 64, 32)
    p["c_w3"], p["c_b3"] = linear(keys[6], 32, 1)
    return p


def acnet_reference(x, p):
    """Pure-JAX reference of the PyTorch forward, for correctness checking."""
    h = jnp.maximum(x @ p["a_w1"] + p["a_b1"], 0.0)
    h = jnp.maximum(h @ p["a_w2"] + p["a_b2"], 0.0)
    mean = h @ p["mu_w"] + p["mu_b"]
    std = jax.nn.softplus(h @ p["sg_w"] + p["sg_b"])
    c = jnp.maximum(x @ p["c_w1"] + p["c_b1"], 0.0)
    c = jnp.maximum(c @ p["c_w2"] + p["c_b2"], 0.0)
    value = c @ p["c_w3"] + p["c_b3"]
    return mean, std, value


if __name__ == "__main__":
    observations = 8
    actions = 4
    batch = 8

    key = jax.random.PRNGKey(0)
    kx, kp = jax.random.split(key)
    x = jax.random.normal(kx, (batch, observations), jnp.float32)
    params = init_params(kp, observations, actions)

    mean, std, value = jax.block_until_ready(
        jax.jit(acnet_forward)(x, params))

    mean_r, std_r, value_r = acnet_reference(x, params)
    assert mean.shape == (batch, actions)
    assert std.shape == (batch, actions)
    assert value.shape == (batch, 1)
    assert jnp.allclose(mean, mean_r, atol=1e-5), "mean mismatch"
    assert jnp.allclose(std, std_r, atol=1e-5), "std mismatch"
    assert jnp.allclose(value, value_r, atol=1e-5), "value mismatch"
    assert bool(jnp.all(std > 0.0)), "softplus output must be positive"

    print("KERNEL_OK")
</pallas_src>

<mosaic_0001>
module attributes {stable_mosaic.version = 11 : i64} {
  func.func @acnet_kernel(%arg0: i32, %arg1: memref<8x8xf32, #tpu.memory_space<vmem>>, %arg2: memref<8x96xf32, #tpu.memory_space<vmem>>, %arg3: memref<1x96xf32, #tpu.memory_space<vmem>>, %arg4: memref<96x48xf32, #tpu.memory_space<vmem>>, %arg5: memref<1x48xf32, #tpu.memory_space<vmem>>, %arg6: memref<48x9xf32, #tpu.memory_space<vmem>>, %arg7: memref<1x9xf32, #tpu.memory_space<vmem>>, %arg8: memref<8x9xf32, #tpu.memory_space<vmem>>) attributes {dimension_semantics = [#tpu.dimension_semantics<parallel>], iteration_bounds = array<i64: 1>, scalar_prefetch = 0 : i64, scratch_operands = 0 : i64, tpu.core_type = #tpu.core_type<tc>, window_params = [{transform_indices = @transform_0, window_bounds = array<i64: 8, 8>}, {pipeline_mode = #tpu.pipeline_mode<synchronous>, transform_indices = @transform_1, window_bounds = array<i64: 8, 96>}, {pipeline_mode = #tpu.pipeline_mode<synchronous>, transform_indices = @transform_2, window_bounds = array<i64: 1, 96>}, {pipeline_mode = #tpu.pipeline_mode<synchronous>, transform_indices = @transform_3, window_bounds = array<i64: 96, 48>}, {pipeline_mode = #tpu.pipeline_mode<synchronous>, transform_indices = @transform_4, window_bounds = array<i64: 1, 48>}, {pipeline_mode = #tpu.pipeline_mode<synchronous>, transform_indices = @transform_5, window_bounds = array<i64: 48, 9>}, {pipeline_mode = #tpu.pipeline_mode<synchronous>, transform_indices = @transform_6, window_bounds = array<i64: 1, 9>}, {transform_indices = @transform_7, window_bounds = array<i64: 8, 9>}]} {
    %c0 = arith.constant 0 : index
    %c0_0 = arith.constant 0 : index
    %0 = vector.load %arg1[%c0, %c0_0] : memref<8x8xf32, #tpu.memory_space<vmem>>, vector<8x8xf32>
    %c0_1 = arith.constant 0 : index
    %c0_2 = arith.constant 0 : index
    %1 = vector.load %arg2[%c0_1, %c0_2] : memref<8x96xf32, #tpu.memory_space<vmem>>, vector<8x96xf32>
    %cst = arith.constant dense<0.000000e+00> : vector<8x96xf32>
    %2 = tpu.matmul %0, %1, %cst {dimension_numbers = #tpu.dot_dimension_numbers<[1], [0], [0], [1], [0, 0, 1, 1], [], []>} : vector<8x8xf32>, vector<8x96xf32>, vector<8x96xf32> -> vector<8x96xf32>
    %c0_3 = arith.constant 0 : index
    %c0_4 = arith.constant 0 : index
    %3 = vector.load %arg3[%c0_3, %c0_4] : memref<1x96xf32, #tpu.memory_space<vmem>>, vector<1x96xf32>
    %4 = vector.broadcast %3 : vector<1x96xf32> to vector<8x96xf32>
    %5 = arith.addf %2, %4 : vector<8x96xf32>
    %cst_5 = arith.constant 0.000000e+00 : f32
    %6 = vector.broadcast %cst_5 : f32 to vector<8x96xf32>
    %7 = arith.maximumf %5, %6 : vector<8x96xf32>
    %c0_6 = arith.constant 0 : index
    %c0_7 = arith.constant 0 : index
    %8 = vector.load %arg4[%c0_6, %c0_7] : memref<96x48xf32, #tpu.memory_space<vmem>>, vector<96x48xf32>
    %cst_8 = arith.constant dense<0.000000e+00> : vector<8x48xf32>
    %9 = tpu.matmul %7, %8, %cst_8 {dimension_numbers = #tpu.dot_dimension_numbers<[1], [0], [0], [1], [0, 0, 1, 1], [], []>} : vector<8x96xf32>, vector<96x48xf32>, vector<8x48xf32> -> vector<8x48xf32>
    %c0_9 = arith.constant 0 : index
    %c0_10 = arith.constant 0 : index
    %10 = vector.load %arg5[%c0_9, %c0_10] : memref<1x48xf32, #tpu.memory_space<vmem>>, vector<1x48xf32>
    %11 = vector.broadcast %10 : vector<1x48xf32> to vector<8x48xf32>
    %12 = arith.addf %9, %11 : vector<8x48xf32>
    %cst_11 = arith.constant 0.000000e+00 : f32
    %13 = vector.broadcast %cst_11 : f32 to vector<8x48xf32>
    %14 = arith.maximumf %12, %13 : vector<8x48xf32>
    %c0_12 = arith.constant 0 : index
    %c0_13 = arith.constant 0 : index
    %15 = vector.load %arg6[%c0_12, %c0_13] : memref<48x9xf32, #tpu.memory_space<vmem>>, vector<48x9xf32>
    %cst_14 = arith.constant dense<0.000000e+00> : vector<8x9xf32>
    %16 = tpu.matmul %14, %15, %cst_14 {dimension_numbers = #tpu.dot_dimension_numbers<[1], [0], [0], [1], [0, 0, 1, 1], [], []>} : vector<8x48xf32>, vector<48x9xf32>, vector<8x9xf32> -> vector<8x9xf32>
    %c0_15 = arith.constant 0 : index
    %c0_16 = arith.constant 0 : index
    %17 = vector.load %arg7[%c0_15, %c0_16] : memref<1x9xf32, #tpu.memory_space<vmem>>, vector<1x9xf32>
    %18 = vector.broadcast %17 : vector<1x9xf32> to vector<8x9xf32>
    %19 = arith.addf %16, %18 : vector<8x9xf32>
    %20 = tpu.iota {dimensions = array<i32: 1>} : vector<8x9xi32>
    %c4_i32 = arith.constant 4 : i32
    %21 = vector.broadcast %c4_i32 : i32 to vector<8x9xi32>
    %22 = arith.cmpi sge, %20, %21 : vector<8x9xi32>
    %c8_i32 = arith.constant 8 : i32
    %23 = vector.broadcast %c8_i32 : i32 to vector<8x9xi32>
    %24 = arith.cmpi slt, %20, %23 : vector<8x9xi32>
    %25 = arith.andi %22, %24 : vector<8x9xi1>
    %cst_17 = arith.constant 0.000000e+00 : f32
    %26 = vector.broadcast %cst_17 : f32 to vector<8x9xf32>
    %27 = arith.maximumf %19, %26 : vector<8x9xf32>
    %28 = math.absf %19 : vector<8x9xf32>
    %cst_18 = arith.constant 0.000000e+00 : f32
    %29 = vector.broadcast %cst_18 : f32 to vector<8x9xf32>
    %30 = arith.subf %29, %28 : vector<8x9xf32>
    %31 = math.exp %30 : vector<8x9xf32>
    %32 = math.log1p %31 : vector<8x9xf32>
    %33 = arith.addf %27, %32 : vector<8x9xf32>
    %34 = arith.select %25, %33, %19 : vector<8x9xi1>, vector<8x9xf32>
    %c0_19 = arith.constant 0 : index
    %c0_20 = arith.constant 0 : index
    %35 = vector.load %arg8[%c0_19, %c0_20] : memref<8x9xf32, #tpu.memory_space<vmem>>, vector<8x9xf32>
    tpu.vector_store %arg8[%c0_19, %c0_20], %34 {strides = array<i32>} : memref<8x9xf32, #tpu.memory_space<vmem>>, vector<8x9xf32>,
    return
  }
  func.func @transform_0(%arg0: i32) -> (i32, i32) {
    %c0_i32 = arith.constant 0 : i32
    %c0_i32_0 = arith.constant 0 : i32
    return %arg0, %c0_i32 : i32, i32
  }
  func.func @transform_1(%arg0: i32) -> (i32, i32) {
    %c0_i32 = arith.constant 0 : i32
    %c0_i32_0 = arith.constant 0 : i32
    %c0_i32_1 = arith.constant 0 : i32
    return %c0_i32, %c0_i32_0 : i32, i32
  }
  func.func @transform_2(%arg0: i32) -> (i32, i32) {
    %c0_i32 = arith.constant 0 : i32
    %c0_i32_0 = arith.constant 0 : i32
    %c0_i32_1 = arith.constant 0 : i32
    return %c0_i32, %c0_i32_0 : i32, i32
  }
  func.func @transform_3(%arg0: i32) -> (i32, i32) {
    %c0_i32 = arith.constant 0 : i32
    %c0_i32_0 = arith.constant 0 : i32
    %c0_i32_1 = arith.constant 0 : i32
    return %c0_i32, %c0_i32_0 : i32, i32
  }
  func.func @transform_4(%arg0: i32) -> (i32, i32) {
    %c0_i32 = arith.constant 0 : i32
    %c0_i32_0 = arith.constant 0 : i32
    %c0_i32_1 = arith.constant 0 : i32
    return %c0_i32, %c0_i32_0 : i32, i32
  }
  func.func @transform_5(%arg0: i32) -> (i32, i32) {
    %c0_i32 = arith.constant 0 : i32
    %c0_i32_0 = arith.constant 0 : i32
    %c0_i32_1 = arith.constant 0 : i32
    return %c0_i32, %c0_i32_0 : i32, i32
  }
  func.func @transform_6(%arg0: i32) -> (i32, i32) {
    %c0_i32 = arith.constant 0 : i32
    %c0_i32_0 = arith.constant 0 : i32
    %c0_i32_1 = arith.constant 0 : i32
    return %c0_i32, %c0_i32_0 : i32, i32
  }
  func.func @transform_7(%arg0: i32) -> (i32, i32) {
    %c0_i32 = arith.constant 0 : i32
    %c0_i32_0 = arith.constant 0 : i32
    return %arg0, %c0_i32 : i32, i32
  }
}

</mosaic_0001>

<llo_original>
// kernel: acnet_forward.1
$region0: #{acnet_forward.1}
  #allocation0 [shape = 'u32[]', space=smem, size = 0x4, offset = 0x4, fixed_abs, tag = 'smem constant byte address 0x4 - core index']
  #allocation1 [shape = 'u32[72,128]{1,0:T(1,128)}', space=vmem, size = 0x9000, scoped, tag = 'internal scratch']
  %s0 = inlined_call_operand.vmem [shape: f32[8,8], index: 0, kind: input, shape index: {}]
  %s1 = inlined_call_operand.vmem [shape: f32[8,96], index: 1, kind: input, shape index: {}]
  %s2 = inlined_call_operand.vmem [shape: f32[1,96], index: 2, kind: input, shape index: {}]
  %s3 = inlined_call_operand.vmem [shape: f32[96,48], index: 3, kind: input, shape index: {}]
  %s4 = inlined_call_operand.vmem [shape: f32[1,48], index: 4, kind: input, shape index: {}]
  %s5 = inlined_call_operand.vmem [shape: f32[48,9], index: 5, kind: input, shape index: {}]
  %s6 = inlined_call_operand.vmem [shape: f32[1,9], index: 6, kind: input, shape index: {}]
  %s7 = inlined_call_operand.vmem [shape: f32[8,9], index: 7, kind: output, shape index: {}]
  %s8 = sld [smem:[#allocation0]]
  $region38: #{acnet_forward.1} parent=0
    _
  %s10 = ssub.s32 1, %s8
  %s11 = scalar_select 0, %s10, %s8
  // Predicated region
  $region2: #{acnet_forward.1} parent=0 // pred_check
    _
  $region3: #{acnet_forward.1} parent=0 // pred_check_branch
    %13 = sbr.rel (0) target = $region5
  $region4: #{acnet_forward.1} parent=0 // pred_region
    _
  $region5: #{acnet_forward.1} parent=0 // pred_fallthru
    _
  // Predicated region
  $region6: #{acnet_forward.1} parent=0 // pred_check
    _
  $region7: #{acnet_forward.1} parent=0 // pred_check_branch
    %15 = sbr.rel (0) target = $region9
  $region8: #{acnet_forward.1} parent=0 // pred_region
    _
  $region9: #{acnet_forward.1} parent=0 // pred_fallthru
    _
  // Predicated region
  $region10: #{acnet_forward.1} parent=0 // pred_check
    _
  $region11: #{acnet_forward.1} parent=0 // pred_check_branch
    %17 = sbr.rel (0) target = $region13
  $region12: #{acnet_forward.1} parent=0 // pred_region
    _
  $region13: #{acnet_forward.1} parent=0 // pred_fallthru
    _
  // Predicated region
  $region14: #{acnet_forward.1} parent=0 // pred_check
    _
  $region15: #{acnet_forward.1} parent=0 // pred_check_branch
    %19 = sbr.rel (0) target = $region17
  $region16: #{acnet_forward.1} parent=0 // pred_region
    _
  $region17: #{acnet_forward.1} parent=0 // pred_fallthru
    _
  // Predicated region
  $region18: #{acnet_forward.1} parent=0 // pred_check
    _
  $region19: #{acnet_forward.1} parent=0 // pred_check_branch
    %21 = sbr.rel (0) target = $region21
  $region20: #{acnet_forward.1} parent=0 // pred_region
    _
  $region21: #{acnet_forward.1} parent=0 // pred_fallthru
    _
  // Predicated region
  $region22: #{acnet_forward.1} parent=0 // pred_check
    _
  $region23: #{acnet_forward.1} parent=0 // pred_check_branch
    %23 = sbr.rel (0) target = $region25
  $region24: #{acnet_forward.1} parent=0 // pred_region
    _
  $region25: #{acnet_forward.1} parent=0 // pred_fallthru
    _
  // Predicated region
  $region26: #{acnet_forward.1} parent=0 // pred_check
    _
  $region27: #{acnet_forward.1} parent=0 // pred_check_branch
    %25 = sbr.rel (0) target = $region29
  $region28: #{acnet_forward.1} parent=0 // pred_region
    _
  $region29: #{acnet_forward.1} parent=0 // pred_fallthru
    _
  %v26 = vld [vmem:[%s0] sm:$0xff]
  %v27 = vld [vmem:[%s1] sm:$0xff]
  %v28 = vld [vmem:[%s2] sm:$0x1]
  %v30 = vperm.slane %v28, 0
  %vm32 = vcmask 64512
  %v34 = vsel %vm32, %v26, 0
  %36 = vmatpush.msra.mxu0 0.0
  %37 = vmatpush.msra.mxu0 0.0
  %38 = vmatpush.msra.mxu0 0.0
  %39 = vmatpush.msra.mxu0 0.0
  %40 = vmatpush.msra.mxu0 0.0
  %41 = vmatpush.msra.mxu0 0.0
  %42 = vmatpush.msra.mxu0 0.0
  %43 = vmatpush.msra.mxu0 0.0
  %44 = vmatpush.msra.mxu0 0.0
  %45 = vmatpush.msra.mxu0 0.0
  %46 = vmatpush.msra.mxu0 0.0
  %47 = vmatpush.msra.mxu0 0.0
  %48 = vmatpush.msra.mxu0 0.0
  %49 = vmatpush.msra.mxu0 0.0
  %50 = vmatpush.msra.mxu0 0.0
  %51 = vmatpush.msra.mxu0 %v27
  %52 = vmatmul.f32.gmra.mxu0 %v34
  %v53 = vpop.f32.mrf.mxu0
  %v54 = vadd.f32 %v30, %v53
  %55 = vdwg.mxu0
  %v56 = vmax.f32 %v54, 0.0
  %v57 = vld [vmem:[%s3] sm:$0xff]
  %v58 = vld [vmem:[%s3 + $0x8] sm:$0xff]
  %v59 = vld [vmem:[%s3 + $0x10] sm:$0xff]
  %v60 = vld [vmem:[%s3 + $0x18] sm:$0xff]
  %v61 = vld [vmem:[%s3 + $0x20] sm:$0xff]
  %v62 = vld [vmem:[%s3 + $0x28] sm:$0xff]
  %v63 = vld [vmem:[%s3 + $0x30] sm:$0xff]
  %v64 = vld [vmem:[%s3 + $0x38] sm:$0xff]
  %v65 = vld [vmem:[%s3 + $0x40] sm:$0xff]
  %v66 = vld [vmem:[%s3 + $0x48] sm:$0xff]
  %v67 = vld [vmem:[%s3 + $0x50] sm:$0xff]
  %v68 = vld [vmem:[%s3 + $0x58] sm:$0xff]
  %v69 = vld [vmem:[%s4] sm:$0x1]
  %v71 = vperm.slane %v69, 0
  %vm73 = vcmask 785408
  %v75 = vsel %vm73, %v56, 0
  %77 = vmatpush.msra.mxu0 0.0
  %78 = vmatpush.msra.mxu0 0.0
  %79 = vmatpush.msra.mxu0 0.0
  %80 = vmatpush.msra.mxu0 0.0
  %81 = vmatpush.msra.mxu0 %v68
  %82 = vmatpush.msra.mxu0 %v67
  %83 = vmatpush.msra.mxu0 %v66
  %84 = vmatpush.msra.mxu0 %v65
  %85 = vmatpush.msra.mxu0 %v64
  %86 = vmatpush.msra.mxu0 %v63
  %87 = vmatpush.msra.mxu0 %v62
  %88 = vmatpush.msra.mxu0 %v61
  %89 = vmatpush.msra.mxu0 %v60
  %90 = vmatpush.msra.mxu0 %v59
  %91 = vmatpush.msra.mxu0 %v58
  %92 = vmatpush.msra.mxu0 %v57
  %93 = vmatmul.f32.gmra.mxu0 %v75
  %v94 = vpop.f32.mrf.mxu0
  %v95 = vadd.f32 %v71, %v94
  %96 = vdwg.mxu0
  %v97 = vmax.f32 %v95, 0.0
  %v98 = vld [vmem:[%s5] sm:$0xff]
  %v99 = vld [vmem:[%s5 + $0x8] sm:$0xff]
  %v100 = vld [vmem:[%s5 + $0x10] sm:$0xff]
  %v101 = vld [vmem:[%s5 + $0x18] sm:$0xff]
  %v102 = vld [vmem:[%s5 + $0x20] sm:$0xff]
  %v103 = vld [vmem:[%s5 + $0x28] sm:$0xff]
  %v104 = vld [vmem:[%s6] sm:$0x1]
  %v106 = vperm.slane %v104, 0
  %vm108 = vcmask 392192
  %v110 = vsel %vm108, %v97, 0
  %112 = vmatpush.msra.mxu0 0.0
  %113 = vmatpush.msra.mxu0 0.0
  %114 = vmatpush.msra.mxu0 0.0
  %115 = vmatpush.msra.mxu0 0.0
  %116 = vmatpush.msra.mxu0 0.0
  %117 = vmatpush.msra.mxu0 0.0
  %118 = vmatpush.msra.mxu0 0.0
  %119 = vmatpush.msra.mxu0 0.0
  %120 = vmatpush.msra.mxu0 0.0
  %121 = vmatpush.msra.mxu0 0.0
  %122 = vmatpush.msra.mxu0 %v103
  %123 = vmatpush.msra.mxu0 %v102
  %124 = vmatpush.msra.mxu0 %v101
  %125 = vmatpush.msra.mxu0 %v100
  %126 = vmatpush.msra.mxu0 %v99
  %127 = vmatpush.msra.mxu0 %v98
  %128 = vmatmul.f32.gmra.mxu0 %v110
  %v129 = vpop.f32.mrf.mxu0
  %v130 = vadd.f32 %v106, %v129
  %131 = vdwg.mxu0
  %v132 = vlaneseq
  %v133 = vand.u32 %v132, 127
  %vm134 = vcmp.ge.s32.totalorder %v133, 4
  %vm135 = vcmp.lt.s32.totalorder %v133, 8
  %vm136 = vmand %vm134, %vm135
  %v137 = vmax.f32 %v130, 0.0
  %v138 = vand.u32 2147483647, %v130
  %v139 = vsub.f32 0.0, %v138
  %v140 = vmul.f32 %v139, 1.442695
  %v141 = vpow.pop %v140
  %v142 = vadd.f32 %v141, 1.0
  %v143 = vlog2.pop %v142
  %v144 = vmul.f32 %v143, 0.6931472
  %v145 = vmul.f32 -0.5, %v141
  %v146 = vadd.f32 %v145, 1.0
  %v147 = vmul.f32 %v146, %v141
  %v148 = vand.u32 2147483647, %v141
  %vm149 = vcmp.lt.f32.partialorder %v148, 0.0004427343
  %v150 = vsel %vm149, %v147, %v144
  %v151 = vadd.f32 %v137, %v150
  %v152 = vsel %vm136, %v151, %v130
  %vm153 = vcmask 72704
  %154 = vst.msk [vmem:[%s7] sm:$0xff] %vm153, %v152
  // Predicated region
  $region30: #{acnet_forward.1} parent=0 // pred_check
    _
  $region31: #{acnet_forward.1} parent=0 // pred_check_branch
    %156 = sbr.rel (0) target = $region33
  $region32: #{acnet_forward.1} parent=0 // pred_region
    _
  $region33: #{acnet_forward.1} parent=0 // pred_fallthru
    _
  // Predicated region
  $region34: #{acnet_forward.1} parent=0 // pred_check
    _
  $region35: #{acnet_forward.1} parent=0 // pred_check_branch
    %158 = sbr.rel (0) target = $region37
  $region36: #{acnet_forward.1} parent=0 // pred_region
    _
  $region37: #{acnet_forward.1} parent=0 // pred_fallthru
    _

</llo_original>
